<compile_context>
chip_gen: v5e
topology: v5e:2x2
jax: 0.10.0
libtpu: 0.0.40
codegen_flags: <defaults>
</compile_context>

<pallas_src>
import functools

import jax
import jax.numpy as jnp
from jax import lax
from jax.experimental import pallas as pl
from jax.experimental.pallas import tpu as pltpu


_LANE_WIDTHS = (2048, 1024, 512, 256, 128)   # preferred lane-dense widths
_FAST_PATH_BYTES = 1 << 20                   # below this, plain-XLA reduction wins


def _round_down(a: int, m: int) -> int:
    return (a // m) * m


def _tpu_info():
    try:
        return pltpu.get_tpu_info()
    except Exception:
        return None


def _vmem_capacity_bytes() -> int:
    info = _tpu_info()
    if info is not None:
        for attr in ("vmem_capacity_bytes", "vmem_bytes", "vmem_size_bytes"):
            v = getattr(info, attr, None)
            if v is None:
                continue
            try:
                iv = int(v)
            except (TypeError, ValueError):
                continue
            if iv > 0:
                return iv
    return 64 << 20   # conservative (v7x-sized) default


def _num_tensorcores() -> int:
    info = _tpu_info()
    if info is not None:
        for attr in ("num_cores", "core_count", "num_tensorcores",
                     "tensorcore_count"):
            v = getattr(info, attr, None)
            if v is None:
                continue
            try:
                iv = int(v)
            except (TypeError, ValueError):
                continue
            if iv > 0:
                return min(iv, 2)
    return 1          # safe default (single-TC v5e/v6e behaviour)


def _l2_sumsq_kernel(x_ref, out_ref, acc_ref, *,
                     n_inner, n_blocks, rows_in_last_block):
    """Accumulate sum(x*x) for one outer ("parallel") group into out_ref[0, 0]."""
    p = pl.program_id(0)   # outer axis (sharded across TensorCores where available)
    i = pl.program_id(1)   # inner reduction axis (serial)
    tile_rows = x_ref.shape[0]

    @pl.when(i == 0)
    def _():
        acc_ref[...] = jnp.zeros_like(acc_ref)

    x = x_ref[...].astype(jnp.float32)
    sq = x * x

    if rows_in_last_block == tile_rows:
        # No partial block anywhere: mask-free hot path (pure VPU + sublane sum).
        acc_ref[...] += jnp.sum(sq, axis=0, keepdims=True)
    else:
        blk = p * n_inner + i

        @pl.when(blk < n_blocks - 1)
        def _():
            acc_ref[...] += jnp.sum(sq, axis=0, keepdims=True)

        @pl.when(blk == n_blocks - 1)
        def _():
            # Only the single partial final block pays for iota + select.
            row_ids = lax.broadcasted_iota(jnp.int32, sq.shape, 0)
            masked = jnp.where(row_ids < rows_in_last_block, sq, 0.0)
            acc_ref[...] += jnp.sum(masked, axis=0, keepdims=True)

    @pl.when(i == pl.num_programs(1) - 1)
    def _():
        # One cross-lane XLU reduce + one SMEM scalar store per outer group.
        out_ref[0, 0] = jnp.sum(acc_ref[...])


def _sum_of_squares_pallas(x, *, block_bytes=None, outer_groups=None):
    """Sum of squares of all elements of `x` via a lane-dense Pallas reduction."""
    n = x.size
    flat = x.reshape(-1)                          # metadata-only; no HBM copy

    lane = None
    for c in _LANE_WIDTHS:
        if n >= c and n % c == 0:
            lane = c
            break
    if lane is None:
        # Element count not lane-divisible.  A prefix slice into pallas_call
        # would materialize an HBM copy (custom calls can't consume views),
        # which costs more traffic than it saves; XLA's fused reduce streams
        # the data exactly once.
        xf = flat.astype(jnp.float32)
        return jnp.sum(xf * xf)

    rows = n // lane
    x2d = flat.reshape(rows, lane)                # lane-dense view

    itemsize = jnp.dtype(x.dtype).itemsize
    big_vmem = _vmem_capacity_bytes() >= (100 << 20)    # v5e/v6e have 128 MiB
    if block_bytes is None:
        block_bytes = (16 << 20) if big_vmem else (8 << 20)
    vmem_limit = (96 << 20) if big_vmem else (44 << 20)

    # Sublane alignment by packed dtype (f32: 8, bf16: 16, int8/fp8: 32).
    sublane_align = 8 * max(1, 4 // itemsize)

    # Rows allowed by the HBM-side block target (sized by the *input* dtype).
    rows_by_target = max(sublane_align, block_bytes // (itemsize * lane))
    # Rows allowed by the scoped-VMEM budget: 2 double-buffered input copies
    # plus ~3 block-sized f32 temporaries for the cast/square/reduce chain,
    # keeping 25% slack.
    per_row_vmem = lane * (2 * itemsize + 3 * 4)
    rows_by_vmem = max(sublane_align, (vmem_limit * 3 // 4) // per_row_vmem)
    target_rows = min(rows_by_target, rows_by_vmem)

    if rows <= target_rows:
        tile_rows = rows                          # single full-extent block
    else:
        tile_rows = max(sublane_align, _round_down(target_rows, sublane_align))

    n_blocks = pl.cdiv(rows, tile_rows)
    rows_in_last_block = rows - (n_blocks - 1) * tile_rows

    # Outer "parallel" axis only when it can actually help (multi-TC chips) and
    # the block count splits evenly (so no clamped/replayed duplicate blocks).
    cores = outer_groups if outer_groups is not None else _num_tensorcores()
    if cores > 1 and n_blocks >= 2 * cores and n_blocks % cores == 0:
        n_outer = cores
    else:
        n_outer = 1
    n_inner = n_blocks // n_outer
    # TODO(synk): on v7x, plain "parallel" may not split the outer axis across
    # the two TensorCores; switch to pltpu.CORE_PARALLEL once validated.

    kernel = functools.partial(
        _l2_sumsq_kernel,
        n_inner=n_inner,
        n_blocks=n_blocks,
        rows_in_last_block=rows_in_last_block,
    )

    partials = pl.pallas_call(
        kernel,
        out_shape=jax.ShapeDtypeStruct((n_outer, 1), jnp.float32),
        grid_spec=pltpu.PrefetchScalarGridSpec(
            num_scalar_prefetch=0,
            grid=(n_outer, n_inner),
            in_specs=[pl.BlockSpec((tile_rows, lane),
                                   lambda p, i: (p * n_inner + i, 0))],
            out_specs=pl.BlockSpec((1, 1), lambda p, i: (p, 0),
                                   memory_space=pltpu.MemorySpace.SMEM),
            scratch_shapes=[pltpu.VMEM((1, lane), jnp.float32)],
        ),
        compiler_params=pltpu.CompilerParams(
            dimension_semantics=("parallel", "arbitrary"),
            vmem_limit_bytes=vmem_limit,
        ),
        cost_estimate=pl.CostEstimate(
            flops=2 * n,
            transcendentals=0,
            bytes_accessed=n * itemsize + 4 * n_outer,
        ),
    )(x2d)
    return jnp.sum(partials)


def _sum_of_squares(x, force_pallas: bool = False, **kwargs):
    x = jnp.asarray(x)
    nbytes = x.size * jnp.dtype(x.dtype).itemsize
    if not force_pallas and nbytes < _FAST_PATH_BYTES:
        # Tiny inputs: pallas_call overhead dominates; plain XLA reduction wins.
        xf = x.astype(jnp.float32)
        return jnp.sum(xf * xf)
    return _sum_of_squares_pallas(x, **kwargs)


class L2:
    """JAX/Pallas port of the PyTorch L2 regularizer."""

    def __init__(self, weight: float):
        self.weight = float(weight)

    def __call__(self, factors):
        factors = [jnp.asarray(f) for f in factors]
        total = jnp.float32(0.0)
        # TODO(synk): multiple large same-dtype factors could be fused into a
        # single pallas_call via scalar-prefetched per-block offsets; kept as
        # per-factor calls (supports ragged shapes, negligible for few factors).
        for f in factors:
            total = total + _sum_of_squares(f)
        # PyTorch: norm / factors[0][0].shape[0]  == factors[0].shape[1]
        # (the row length of the first factor, i.e. the rank for 2-D factors).
        divisor = factors[0].shape[1]
        return self.weight * total / jnp.float32(divisor)


if __name__ == "__main__":
    key = jax.random.PRNGKey(0)
    k1, k2, k3, k4 = jax.random.split(key, 4)

    # Small example matching the module's typical (batch, rank) factor use.
    B, R = 8, 32
    lhs = jax.random.normal(k1, (B, R), dtype=jnp.float32)
    rel = jax.random.normal(k2, (B, R), dtype=jnp.float32)
    rhs = jax.random.normal(k3, (B, R), dtype=jnp.float32)

    reg = L2(weight=0.1)
    out_small = jax.block_until_ready(reg((lhs, rel, rhs)))
    ref_small = 0.1 * (jnp.sum(lhs ** 2) + jnp.sum(rel ** 2) + jnp.sum(rhs ** 2)) / R
    assert jnp.allclose(out_small, ref_small, rtol=1e-5, atol=1e-5), (out_small, ref_small)

    # Force the Pallas path on a small factor (single full-extent block).
    got_s = jax.block_until_ready(_sum_of_squares(lhs, force_pallas=True))
    want_s = jnp.sum(lhs.astype(jnp.float32) ** 2)
    assert jnp.allclose(got_s, want_s, rtol=1e-5, atol=1e-5), (got_s, want_s)

    # Medium factor exercising the multi-block grid and the pl.when-gated
    # partial final block (block size overridden downward to keep the test small).
    big = jax.random.normal(k4, (4104, 384), dtype=jnp.float32)
    got = jax.block_until_ready(
        _sum_of_squares(big, force_pallas=True, block_bytes=1 << 20))
    want = jnp.sum(big.astype(jnp.float32) ** 2)
    assert jnp.allclose(got, want, rtol=1e-4), (got, want)

    print("KERNEL_OK")
</pallas_src>

<mosaic_0001>
module attributes {stable_mosaic.version = 11 : i64} {
  func.func @_l2_sumsq_kernel(%arg0: i32, %arg1: i32, %arg2: memref<1x256xf32, #tpu.memory_space<vmem>>, %arg3: memref<1x1xf32, #tpu.memory_space<smem>>, %arg4: memref<1x256xf32, #tpu.memory_space<vmem>>) attributes {dimension_semantics = [#tpu.dimension_semantics<parallel>, #tpu.dimension_semantics<arbitrary>], iteration_bounds = array<i64: 1, 1>, scalar_prefetch = 0 : i64, scratch_operands = 1 : i64, tpu.core_type = #tpu.core_type<tc>, window_params = [{transform_indices = @transform_0, window_bounds = array<i64: 1, 256>}, {transform_indices = @transform_1, window_bounds = array<i64: 1, 1>}]} {
    %c0_i32 = arith.constant 0 : i32
    %0 = arith.cmpi eq, %arg1, %c0_i32 : i32
    %1 = arith.extui %0 : i1 to i32
    %c0_i32_0 = arith.constant 0 : i32
    %2 = arith.cmpi ne, %1, %c0_i32_0 : i32
    scf.if %2 {
      %cst_8 = arith.constant 0.000000e+00 : f32
      %13 = vector.broadcast %cst_8 : f32 to vector<1x256xf32>
      %c0_9 = arith.constant 0 : index
      %c0_10 = arith.constant 0 : index
      %14 = vector.load %arg4[%c0_9, %c0_10] : memref<1x256xf32, #tpu.memory_space<vmem>>, vector<1x256xf32>
      tpu.vector_store %arg4[%c0_9, %c0_10], %13 {strides = array<i32>} : memref<1x256xf32, #tpu.memory_space<vmem>>, vector<1x256xf32>,
    } else {
    }
    %c0 = arith.constant 0 : index
    %c0_1 = arith.constant 0 : index
    %3 = vector.load %arg2[%c0, %c0_1] : memref<1x256xf32, #tpu.memory_space<vmem>>, vector<1x256xf32>
    %4 = arith.mulf %3, %3 : vector<1x256xf32>
    %c0_2 = arith.constant 0 : index
    %c0_3 = arith.constant 0 : index
    %5 = vector.load %arg4[%c0_2, %c0_3] : memref<1x256xf32, #tpu.memory_space<vmem>>, vector<1x256xf32>
    %cst = arith.constant dense<0.000000e+00> : vector<256xf32>
    %6 = vector.multi_reduction <add>, %4, %cst [0] : vector<1x256xf32> to vector<256xf32>
    %7 = vector.shape_cast %6 : vector<256xf32> to vector<1x256xf32>
    %8 = arith.addf %5, %7 : vector<1x256xf32>
    %c0_4 = arith.constant 0 : index
    %c0_5 = arith.constant 0 : index
    %9 = vector.load %arg4[%c0_4, %c0_5] : memref<1x256xf32, #tpu.memory_space<vmem>>, vector<1x256xf32>
    tpu.vector_store %arg4[%c0_4, %c0_5], %8 {strides = array<i32>} : memref<1x256xf32, #tpu.memory_space<vmem>>, vector<1x256xf32>,
    %c0_i32_6 = arith.constant 0 : i32
    %10 = arith.cmpi eq, %arg1, %c0_i32_6 : i32
    %11 = arith.extui %10 : i1 to i32
    %c0_i32_7 = arith.constant 0 : i32
    %12 = arith.cmpi ne, %11, %c0_i32_7 : i32
    scf.if %12 {
      %c0_8 = arith.constant 0 : index
      %c0_9 = arith.constant 0 : index
      %13 = vector.load %arg4[%c0_8, %c0_9] : memref<1x256xf32, #tpu.memory_space<vmem>>, vector<1x256xf32>
      %14 = vector.shape_cast %13 : vector<1x256xf32> to vector<1x1x256xf32>
      %cst_10 = arith.constant dense<0.000000e+00> : vector<1xf32>
      %15 = vector.multi_reduction <add>, %14, %cst_10 [1, 2] : vector<1x1x256xf32> to vector<1xf32>
      %16 = vector.shape_cast %15 : vector<1xf32> to vector<1x1x1xf32>
      %17 = vector.extract %16[0, 0, 0] : f32 from vector<1x1x1xf32>
      %c0_11 = arith.constant 0 : index
      %c0_12 = arith.constant 0 : index
      %18 = memref.load %arg3[%c0_11, %c0_12] : memref<1x1xf32, #tpu.memory_space<smem>>
      memref.store %17, %arg3[%c0_11, %c0_12] : memref<1x1xf32, #tpu.memory_space<smem>>
    } else {
    }
    return
  }
  func.func @transform_0(%arg0: i32, %arg1: i32) -> (i32, i32) {
    %c1_i32 = arith.constant 1 : i32
    %0 = arith.muli %arg0, %c1_i32 : i32
    %1 = arith.addi %0, %arg1 : i32
    %c0_i32 = arith.constant 0 : i32
    %c0_i32_0 = arith.constant 0 : i32
    return %1, %c0_i32 : i32, i32
  }
  func.func @transform_1(%arg0: i32, %arg1: i32) -> (i32, i32) {
    %c0_i32 = arith.constant 0 : i32
    %c0_i32_0 = arith.constant 0 : i32
    return %arg0, %c0_i32 : i32, i32
  }
}

</mosaic_0001>

<llo_original>
// kernel: tpu_custom_call.1
$region0: #{tpu_custom_call.1}
  #allocation0 [shape = 'u32[]', space=smem, size = 0x4, offset = 0x4, fixed_abs, tag = 'smem constant byte address 0x4 - core index']
  #allocation1 [shape = 'u32[72,128]{1,0:T(1,128)}', space=vmem, size = 0x9000, scoped, tag = 'internal scratch']
  #allocation2 [shape = 'f32[1,256]{1,0:T(1,128)}', space=vmem, size = 0x400, scoped, tag = 'scratch operand']
  %s0 = inlined_call_operand.hbm [shape: f32[1,256], index: 0, kind: input, shape index: {}]
  %s1 = inlined_call_operand.hbm [shape: f32[1,1], index: 1, kind: output, shape index: {}]
  %s2 = sld [smem:[#allocation0]]
  $region26: #{tpu_custom_call.1} parent=0
    _
  %s4 = ssub.s32 1, %s2
  %s5 = scalar_select 0, %s4, %s2
  $region1: #{tpu_custom_call.1} parent=0
    #allocation3 [shape = 'u8[1024]{0}', space=vmem, size = 0x400, scoped, tag = 'input window, operand 0, single buffered']
    #allocation4 [shape = 's32[1]{0}', space=sflag, size = 0x4, scoped, tag = 'scoped memory for tpu_custom_call.1']
    #allocation5 [shape = 's32[1]{0}', space=sflag, size = 0x4, scoped, tag = 'scoped memory for tpu_custom_call.1']
    #allocation6 [shape = 'u8[512]{0}', space=smem, size = 0x200, scoped, tag = 'output window, operand 0, single buffered']
    %6 = vsyncpa [#allocation4], 0
    %7 = vsyncpa [#allocation5], 0
    // Predicated region
    $region2: #{tpu_custom_call.1} parent=1 // pred_check
      _
    $region3: #{tpu_custom_call.1} parent=1 // pred_check_branch
      %9 = sbr.rel (0) target = $region5
    $region4: #{tpu_custom_call.1} parent=1 // pred_region
      %s10 = sadd.s32 0, 0
      %12 = vsyncadd [#allocation4], 0
      %s13 = smul.addr %s10, 2
      %s14 = scalar_lea.hbm %s0, %s13
      %s16 = sshll.u32 %s14, 4
      %s17 = int_to_ptr.hbm [resolvable:$true] %s16
      %s18 = sshll.u32 [#allocation3], 4
      %s19 = int_to_ptr.vmem [resolvable:$true] %s18
      %21 = dma.hbm_to_vmem [thread:$0]  %s17, 32, %s19, [#allocation4]
    $region5: #{tpu_custom_call.1} parent=1 // pred_fallthru
      _
    // Predicated region
    $region6: #{tpu_custom_call.1} parent=1 // pred_check
      _
    $region7: #{tpu_custom_call.1} parent=1 // pred_check_branch
      %23 = sbr.rel (0) target = $region9
    $region8: #{tpu_custom_call.1} parent=1 // pred_region
      %25 = dma.done [#allocation4], 32
    $region9: #{tpu_custom_call.1} parent=1 // pred_fallthru
      _
    %s26 = sadd.s32 0, 0
    %p27 = scmp.eq.s32.totalorder 0, 0
    // Predicated region
    $region10: #{tpu_custom_call.1} parent=1 // pred_check
      %p28 = pneg %p27
    $region11: #{tpu_custom_call.1} parent=1 // pred_check_branch
      %30 = sbr.rel (%p28) target = $region13
    $region12: #{tpu_custom_call.1} parent=1 // pred_region
      %v31 = vlaneseq
      %vm32 = vcmp.ge.s32.totalorder %v31, 0
      %vm33 = vcmp.lt.s32.totalorder %v31, 256
      %vm34 = vmand %vm32, %vm33
      %35 = vst.msk [vmem:[#allocation2] sm:$0x3] %vm34, 0.0
    $region13: #{tpu_custom_call.1} parent=1 // pred_fallthru
      _
    %v36 = vld [vmem:[#allocation3] sm:$0x3]
    %v37 = vmul.f32 %v36, %v36
    %v38 = vld [vmem:[#allocation2] sm:$0x3]
    %v39 = vadd.f32 %v37, 0.0
    %v40 = vadd.f32 %v38, %v39
    %v41 = vlaneseq
    %vm42 = vcmp.ge.s32.totalorder %v41, 0
    %vm43 = vcmp.lt.s32.totalorder %v41, 256
    %vm44 = vmand %vm42, %vm43
    %45 = vst.msk [vmem:[#allocation2] sm:$0x3] %vm44, %v40
    // Predicated region
    $region14: #{tpu_custom_call.1} parent=1 // pred_check
      %p46 = pneg %p27
    $region15: #{tpu_custom_call.1} parent=1 // pred_check_branch
      %48 = sbr.rel (%p46) target = $region17
    $region16: #{tpu_custom_call.1} parent=1 // pred_region
      %v49 = vld [vmem:[#allocation2] sm:$0x3]
      %v51 = vperm.slane %v49, 0
      %v52 = vperm.slane %v49, 1
      %vm55 = vcmask 1040384
      %v56 = vsel %vm55, %v51, 0.0
      %v57 = vsel %vm55, %v52, 0.0
      %v58 = vadd.f32 %v56, %v57
      %59 = vadd.xlane.f32.xlu0 %v58
      %v60 = vpop.xlane.xlu0 %59
      %v61 = vrot.slane %v60, 4
      %v62 = vadd.f32 %v60, %v61
      %v63 = vrot.slane %v62, 2
      %v64 = vadd.f32 %v62, %v63
      %v65 = vrot.slane %v64, 1
      %v66 = vadd.f32 %v64, %v65
      %s67 = vtos %v66
      %s68 = scalar_lea.smem [#allocation6], 0
      %69 = sst [smem:[%s68]] %s67
    $region17: #{tpu_custom_call.1} parent=1 // pred_fallthru
      _
    // Predicated region
    $region18: #{tpu_custom_call.1} parent=1 // pred_check
      _
    $region19: #{tpu_custom_call.1} parent=1 // pred_check_branch
      %71 = sbr.rel (0) target = $region21
    $region20: #{tpu_custom_call.1} parent=1 // pred_region
      %73 = vsyncadd [#allocation5], 0
      %s75 = sshll.u32 %s1, 4
      %s76 = int_to_ptr.hbm [resolvable:$true] %s75
      %78 = dma.smem_to_hbm [#allocation6], 16, %s76, [#allocation5]
    $region21: #{tpu_custom_call.1} parent=1 // pred_fallthru
      _
    // Predicated region
    $region22: #{tpu_custom_call.1} parent=1 // pred_check
      _
    $region23: #{tpu_custom_call.1} parent=1 // pred_check_branch
      %80 = sbr.rel (0) target = $region25
    $region24: #{tpu_custom_call.1} parent=1 // pred_region
      %82 = dma.done [#allocation5], 16
    $region25: #{tpu_custom_call.1} parent=1 // pred_fallthru
      _
    %83 = sfence
    %84 = vsyncpa [#allocation4], 1
    %85 = vsyncpa [#allocation5], 1

</llo_original>
